<compile_context>
chip_gen: v5e
topology: v5e:2x2
jax: 0.10.0
libtpu: 0.0.40
codegen_flags: <defaults>
</compile_context>

<pallas_src>
import functools
import math

import jax
import jax.numpy as jnp
from jax import lax
from jax.experimental import pallas as pl
from jax.experimental.pallas import tpu as pltpu


_TARGET_TILE_BYTES = 4 * 1024 * 1024  # ~4 MiB/step; 6-8 MiB also fine on v6e/v7x


def _round_up(x, m):
    return ((x + m - 1) // m) * m


def _sublane_multiple(dtype):
    # f32 -> 8, bf16 -> 16, int8/fp8 -> 32 (sub-32-bit dtypes pack along sublanes).
    itemsize = jnp.dtype(dtype).itemsize
    return 8 * max(1, 4 // max(1, itemsize))


def _choose_tiles(B, T, H, dtype, target_bytes):
    """Pick (b_tile, t_tile) so one step's *padded* VMEM blocks are ~target_bytes."""
    itemsize = jnp.dtype(dtype).itemsize
    sub = _sublane_multiple(dtype)
    h_pad = _round_up(H, 128)                    # lane padding of the s/ctx blocks
    t_pad = _round_up(T, sub)
    row_bytes = h_pad * itemsize                 # one padded row of s

    # Padded bytes per batch element per step: s block + ctx block + out block.
    per_batch = (t_pad * h_pad + 8 * h_pad + t_pad * 128) * itemsize

    if per_batch <= target_bytes:
        # Whole T per step; block batches so a step still moves ~target_bytes.
        b_tile = int(min(B, max(1, target_bytes // per_batch)))
        t_tile = T
    else:
        b_tile = 1
        rows = int(min(max(sub, target_bytes // row_bytes), T))
        if rows >= T and (T < 128 or T % 128 == 0):
            t_tile = T
        elif rows >= 128:
            t_tile = (rows // 128) * 128         # multiple of 128 -> lane-dense store
        else:
            t_tile = max(sub, (rows // sub) * sub)

    n_b, n_t = pl.cdiv(B, b_tile), pl.cdiv(T, t_tile)

    # Best effort: >= 8 grid steps (v7x has 2 TCs; also gives the pipeline
    # enough steps to overlap DMA).  Split batch first, then T; never split T
    # below 128 once it is lane-dense aligned.
    min_steps = 8
    while n_b * n_t < min_steps and b_tile > 1:
        b_tile = (b_tile + 1) // 2
        n_b = pl.cdiv(B, b_tile)
    while n_b * n_t < min_steps:
        gran = 128 if t_tile % 128 == 0 else sub
        if t_tile <= gran:
            break
        t_tile = max(gran, ((t_tile // 2) // gran) * gran)
        n_t = pl.cdiv(T, t_tile)

    return b_tile, t_tile


def _dot_score_kernel(s_ref, ctx_ref, out_ref, *, inv_sqrt_h):
    # s_ref: (b_tile, t_tile, H)  ctx_ref: (b_tile, 1, H)  out_ref: (b_tile, t_tile, 1)
    s = s_ref[...].astype(jnp.float32)
    ctx = ctx_ref[...].astype(jnp.float32)
    # VPU broadcast-multiply (ctx broadcasts over the T sublanes) + XLU lane
    # reduction; deliberately not an MXU matvec for the column-output path.
    score = jnp.sum(s * ctx, axis=-1, keepdims=True) * inv_sqrt_h
    out_ref[...] = score.astype(out_ref.dtype)


def _dot_score_kernel_lane_dense(s_ref, ctx_ref, out_ref, *, inv_sqrt_h):
    # s_ref: (1, t_tile, H)  ctx_ref: (1, 1, H)  out_ref: (1, 1, t_tile)
    s = s_ref[0].astype(jnp.float32)             # (t_tile, H)
    ctx = ctx_ref[0].astype(jnp.float32)         # (1, H)
    # ctx @ s^T on the otherwise-idle MXU: the result lands directly in
    # (1, t_tile) row form -> unmasked lane-dense stores, no XLU transpose and
    # no t_tile/8 masked single-lane stores per step.
    row = lax.dot_general(
        ctx, s, (((1,), (1,)), ((), ())),
        preferred_element_type=jnp.float32,
        precision=lax.Precision.HIGHEST)
    out_ref[0] = (row * inv_sqrt_h).astype(out_ref.dtype)


def dot_score(s, context, H, *, target_tile_bytes=_TARGET_TILE_BYTES):
    """s: [B, T, H], context: [B, H] -> score: [B, T, 1] (matches torch.bmm)."""
    B, T, Hdim = s.shape
    assert Hdim == H, (Hdim, H)
    assert context.shape == (B, H), (context.shape, B, H)
    inv_sqrt_h = 1.0 / math.sqrt(H)

    b_tile, t_tile = _choose_tiles(B, T, H, s.dtype, target_tile_bytes)
    grid = (pl.cdiv(B, b_tile), pl.cdiv(T, t_tile))
    # (b_tile, 1, H) context blocks are (8,128)-legal for any b_tile and cost
    # ~KBs per step instead of keeping the whole (B, H) array resident.
    ctx3 = context.reshape(B, 1, H)

    in_specs = [
        pl.BlockSpec((b_tile, t_tile, H), lambda b, t: (b, t, 0)),   # streamed s
        pl.BlockSpec((b_tile, 1, H), lambda b, t: (b, 0, 0)),        # per-block ctx
    ]
    itemsize = jnp.dtype(s.dtype).itemsize
    cost = pl.CostEstimate(
        flops=2 * B * T * H,
        transcendentals=0,
        bytes_accessed=B * T * H * itemsize + B * H * itemsize + B * T * itemsize,
    )
    compiler_params = pltpu.CompilerParams(
        dimension_semantics=("parallel", "parallel"),
    )

    lane_dense = (b_tile == 1) and (t_tile % 128 == 0)
    if lane_dense:
        out = pl.pallas_call(
            functools.partial(_dot_score_kernel_lane_dense, inv_sqrt_h=inv_sqrt_h),
            out_shape=jax.ShapeDtypeStruct((B, 1, T), s.dtype),
            grid_spec=pltpu.PrefetchScalarGridSpec(
                num_scalar_prefetch=0,
                grid=grid,
                in_specs=in_specs,
                out_specs=pl.BlockSpec((1, 1, t_tile), lambda b, t: (b, 0, t)),
            ),
            compiler_params=compiler_params,
            cost_estimate=cost,
        )(s, ctx3)
        # (B, 1, T) -> (B, T, 1): same element order, tiny output.
        return out.reshape(B, T, 1)

    return pl.pallas_call(
        functools.partial(_dot_score_kernel, inv_sqrt_h=inv_sqrt_h),
        out_shape=jax.ShapeDtypeStruct((B, T, 1), s.dtype),
        grid_spec=pltpu.PrefetchScalarGridSpec(
            num_scalar_prefetch=0,
            grid=grid,
            in_specs=in_specs,
            out_specs=pl.BlockSpec((b_tile, t_tile, 1), lambda b, t: (b, t, 0)),
        ),
        compiler_params=compiler_params,
        cost_estimate=cost,
    )(s, ctx3)


def _reference(s, context, H):
    # Pure VPU f32 reference (no XLA matmul precision ambiguity).
    return (jnp.sum(s * context[:, None, :], axis=-1, keepdims=True)
            / math.sqrt(H)).astype(s.dtype)


def _check(B, T, H, target_tile_bytes=_TARGET_TILE_BYTES, tol=1e-5):
    key = jax.random.fold_in(jax.random.PRNGKey(0), B * 1000 + T * 10 + H)
    ks, kc = jax.random.split(key)
    s = jax.random.normal(ks, (B, T, H), dtype=jnp.float32)
    context = jax.random.normal(kc, (B, H), dtype=jnp.float32)
    out = jax.block_until_ready(
        dot_score(s, context, H, target_tile_bytes=target_tile_bytes))
    ref = _reference(s, context, H)
    assert out.shape == (B, T, 1), out.shape
    err = float(jnp.max(jnp.abs(out - ref)))
    assert bool(jnp.allclose(out, ref, atol=tol, rtol=tol)), (B, T, H, err)


if __name__ == "__main__":
    # Module-consistent small shape (whole-T-per-step regime).
    _check(2, 8, 32)
    # Batch-tiled regime (b_tile > 1 per grid step).
    _check(64, 8, 32)
    # T-tiled regime, column output (t_tile < 128); small budget forces tiling.
    _check(2, 96, 32, target_tile_bytes=16 * 1024)
    # T-tiled regime, lane-dense row output (t_tile % 128 == 0).  Looser
    # tolerance: the MXU f32 contraction may be decomposed into bf16 passes.
    _check(2, 512, 32, target_tile_bytes=128 * 1024, tol=1e-2)
    print("KERNEL_OK")
</pallas_src>

<mosaic_0001>
module attributes {stable_mosaic.version = 11 : i64} {
  func.func @_dot_score_kernel(%arg0: i32, %arg1: i32, %arg2: memref<1x8x32xf32, #tpu.memory_space<vmem>>, %arg3: memref<1x1x32xf32, #tpu.memory_space<vmem>>, %arg4: memref<1x8x1xf32, #tpu.memory_space<vmem>>) attributes {dimension_semantics = [#tpu.dimension_semantics<parallel>, #tpu.dimension_semantics<parallel>], iteration_bounds = array<i64: 2, 1>, scalar_prefetch = 0 : i64, scratch_operands = 0 : i64, tpu.core_type = #tpu.core_type<tc>, window_params = [{transform_indices = @transform_0, window_bounds = array<i64: 1, 8, 32>}, {transform_indices = @transform_1, window_bounds = array<i64: 1, 1, 32>}, {transform_indices = @transform_2, window_bounds = array<i64: 1, 8, 1>}]} {
    %c0 = arith.constant 0 : index
    %c0_0 = arith.constant 0 : index
    %c0_1 = arith.constant 0 : index
    %0 = vector.load %arg2[%c0, %c0_0, %c0_1] : memref<1x8x32xf32, #tpu.memory_space<vmem>>, vector<1x8x32xf32>
    %c0_2 = arith.constant 0 : index
    %c0_3 = arith.constant 0 : index
    %c0_4 = arith.constant 0 : index
    %1 = vector.load %arg3[%c0_2, %c0_3, %c0_4] : memref<1x1x32xf32, #tpu.memory_space<vmem>>, vector<1x1x32xf32>
    %2 = vector.broadcast %1 : vector<1x1x32xf32> to vector<1x8x32xf32>
    %3 = arith.mulf %0, %2 : vector<1x8x32xf32>
    %cst = arith.constant dense<0.000000e+00> : vector<1x8xf32>
    %4 = vector.multi_reduction <add>, %3, %cst [2] : vector<1x8x32xf32> to vector<1x8xf32>
    %5 = vector.shape_cast %4 : vector<1x8xf32> to vector<1x8x1xf32>
    %cst_5 = arith.constant 0.176776692 : f32
    %6 = vector.broadcast %cst_5 : f32 to vector<1x8x1xf32>
    %7 = arith.mulf %5, %6 : vector<1x8x1xf32>
    %c0_6 = arith.constant 0 : index
    %c0_7 = arith.constant 0 : index
    %c0_8 = arith.constant 0 : index
    %8 = vector.load %arg4[%c0_6, %c0_7, %c0_8] : memref<1x8x1xf32, #tpu.memory_space<vmem>>, vector<1x8x1xf32>
    tpu.vector_store %arg4[%c0_6, %c0_7, %c0_8], %7 {strides = array<i32>} : memref<1x8x1xf32, #tpu.memory_space<vmem>>, vector<1x8x1xf32>,
    return
  }
  func.func @transform_0(%arg0: i32, %arg1: i32) -> (i32, i32, i32) {
    %c0_i32 = arith.constant 0 : i32
    %c0_i32_0 = arith.constant 0 : i32
    return %arg0, %arg1, %c0_i32 : i32, i32, i32
  }
  func.func @transform_1(%arg0: i32, %arg1: i32) -> (i32, i32, i32) {
    %c0_i32 = arith.constant 0 : i32
    %c0_i32_0 = arith.constant 0 : i32
    %c0_i32_1 = arith.constant 0 : i32
    return %arg0, %c0_i32, %c0_i32_0 : i32, i32, i32
  }
  func.func @transform_2(%arg0: i32, %arg1: i32) -> (i32, i32, i32) {
    %c0_i32 = arith.constant 0 : i32
    %c0_i32_0 = arith.constant 0 : i32
    return %arg0, %arg1, %c0_i32 : i32, i32, i32
  }
}

</mosaic_0001>

<llo_original>
// kernel: tpu_custom_call.1
$region0: #{tpu_custom_call.1}
  #allocation0 [shape = 'u32[]', space=smem, size = 0x4, offset = 0x4, fixed_abs, tag = 'smem constant byte address 0x4 - core index']
  #allocation1 [shape = 'u32[72,128]{1,0:T(1,128)}', space=vmem, size = 0x9000, scoped, tag = 'internal scratch']
  %s0 = inlined_call_operand.hbm [shape: f32[2,8,32], index: 0, kind: input, shape index: {}]
  %s1 = inlined_call_operand.hbm [shape: f32[2,1,32], index: 1, kind: input, shape index: {}]
  %s2 = inlined_call_operand.vmem [shape: f32[2,8,1], index: 2, kind: output, shape index: {}]
  %s3 = sld [smem:[#allocation0]]
  $region49: #{tpu_custom_call.1} parent=0
    _
  %s5 = ssub.s32 1, %s3
  %s6 = scalar_select 0, %s5, %s3
  $region1: #{tpu_custom_call.1} parent=0
    #allocation2 [shape = 'u8[8192]{0}', space=vmem, size = 0x2000, scoped, tag = 'input window, operand 0']
    #allocation3 [shape = 's32[2]{0}', space=sflag, size = 0x8, scoped, tag = 'scoped memory for tpu_custom_call.1']
    #allocation4 [shape = 'u8[1024]{0}', space=vmem, size = 0x400, scoped, tag = 'input window, operand 1']
    #allocation5 [shape = 's32[2]{0}', space=sflag, size = 0x8, scoped, tag = 'scoped memory for tpu_custom_call.1']
    %7 = vsyncpa [#allocation3], 0
    %s8 = scalar_lea.sflag [#allocation3], 1
    %9 = vsyncpa %s8, 0
    %10 = vsyncpa [#allocation5], 0
    %s11 = scalar_lea.sflag [#allocation5], 1
    %12 = vsyncpa %s11, 0
    loop: start=0, step=1, limit=4
    $region2: #{tpu_custom_call.1} parent=1 // loop_pre_header
      _
    $region3: #{tpu_custom_call.1} parent=1 // loop_header
      %s14 = sphi 0, %s18
      %p15 = scmp.ge.s32.totalorder %s14, 4
      %s21 = sphi 0, %s33
      %s22 = sphi 0, %s29
      %s23 = sphi 0, %s21
      %s24 = sphi 0, %s22
      %s25 = sphi 0, %s23
      %s26 = sphi 0, %s24
      %s38 = sphi 0, %s40
      %s41 = sphi 0, %s38
      %s42 = sphi 0, %s41
      %s58 = sphi 0, %s42
      %s64 = sphi 0, %s66
      %s67 = sphi 0, %s64
      %s68 = sphi 0, %s67
      %s84 = sphi 0, %s68
      %s92 = sphi 0, %s94
      %s95 = sphi 0, %s92
      %s96 = sphi 0, %s95
      %s112 = sphi 0, %s96
    $region4: #{tpu_custom_call.1} parent=1 // loop_header_branch
      %17 = sbr.rel (%p15) target = $region8
    $region5: #{tpu_custom_call.1} parent=1 // loop_body
      %s19 = ssub.s32 %s14, 1
      %s20 = ssub.s32 %s14, 2
      %s27 = sadd.s32 1, %s22
      %p28 = scmp.ge.s32.totalorder %s27, 1
      %s29 = scalar_select %p28, 0, %s27
      %s30 = sadd.s32 1, %s21
      %s31 = scalar_select %p28, %s30, %s21
      %p32 = scmp.ge.s32.totalorder %s31, 2
      %s33 = scalar_select %p32, 0, %s31
      %s34 = ssub.s32 %s21, %s33
      %s35 = ssub.s32 %s22, %s29
      %s36 = sor.u32 %s34, %s35
      %p37 = scmp.eq.s32.totalorder %s36, 0
      %s39 = sadd.s32 %s38, 1
      %s40 = scalar_select %p37, %s38, %s39
      %p43 = pneg %p37
      %p44 = scmp.eq.s32.totalorder %s14, 1
      %p45 = por %p43, %p44
      %p46 = scmp.ne.s32.totalorder %s38, %s41
      %p47 = scmp.eq.s32.totalorder %s14, 0
      %p48 = por %p46, %p47
      %p49 = scmp.ne.s32.totalorder %s38, %s41
      %p50 = scmp.eq.s32.totalorder %s19, 1
      %p51 = por %p49, %p50
      %p52 = scmp.ne.s32.totalorder %s41, %s42
      %p53 = scmp.eq.s32.totalorder %s19, 0
      %p54 = por %p52, %p53
      %p55 = scmp.ne.s32.totalorder %s41, %s42
      %p56 = scmp.eq.s32.totalorder %s20, 1
      %p57 = por %p55, %p56
      %p59 = scmp.ne.s32.totalorder %s42, %s58
      %p60 = scmp.eq.s32.totalorder %s20, 0
      %p61 = por %p59, %p60
      %s62 = ssub.s32 %s21, %s33
      %p63 = scmp.eq.s32.totalorder %s62, 0
      %s65 = sadd.s32 %s64, 1
      %s66 = scalar_select %p63, %s64, %s65
      %p69 = pneg %p63
      %p70 = scmp.eq.s32.totalorder %s14, 1
      %p71 = por %p69, %p70
      %p72 = scmp.ne.s32.totalorder %s64, %s67
      %p73 = scmp.eq.s32.totalorder %s14, 0
      %p74 = por %p72, %p73
      %p75 = scmp.ne.s32.totalorder %s64, %s67
      %p76 = scmp.eq.s32.totalorder %s19, 1
      %p77 = por %p75, %p76
      %p78 = scmp.ne.s32.totalorder %s67, %s68
      %p79 = scmp.eq.s32.totalorder %s19, 0
      %p80 = por %p78, %p79
      %p81 = scmp.ne.s32.totalorder %s67, %s68
      %p82 = scmp.eq.s32.totalorder %s20, 1
      %p83 = por %p81, %p82
      %p85 = scmp.ne.s32.totalorder %s68, %s84
      %p86 = scmp.eq.s32.totalorder %s20, 0
      %p87 = por %p85, %p86
      %s88 = ssub.s32 %s21, %s33
      %s89 = ssub.s32 %s22, %s29
      %s90 = sor.u32 %s88, %s89
      %p91 = scmp.eq.s32.totalorder %s90, 0
      %s93 = sadd.s32 %s92, 1
      %s94 = scalar_select %p91, %s92, %s93
      %p97 = pneg %p91
      %p98 = scmp.eq.s32.totalorder %s14, 1
      %p99 = por %p97, %p98
      %p100 = scmp.ne.s32.totalorder %s92, %s95
      %p101 = scmp.eq.s32.totalorder %s14, 0
      %p102 = por %p100, %p101
      %p103 = scmp.ne.s32.totalorder %s92, %s95
      %p104 = scmp.eq.s32.totalorder %s19, 1
      %p105 = por %p103, %p104
      %p106 = scmp.ne.s32.totalorder %s95, %s96
      %p107 = scmp.eq.s32.totalorder %s19, 0
      %p108 = por %p106, %p107
      %p109 = scmp.ne.s32.totalorder %s95, %s96
      %p110 = scmp.eq.s32.totalorder %s20, 1
      %p111 = por %p109, %p110
      %p113 = scmp.ne.s32.totalorder %s96, %s112
      %p114 = scmp.eq.s32.totalorder %s20, 0
      %p115 = por %p113, %p114
      %p116 = scmp.le.s32.totalorder 1, %s14
      %p117 = scmp.lt.s32.totalorder %s14, 3
      %p118 = pnand %p116, %p117
      %p119 = pneg %p118
      // Predicated region
      $region9: #{tpu_custom_call.1} parent=5 // pred_check
        _
      $region10: #{tpu_custom_call.1} parent=5 // pred_check_branch
        %121 = sbr.rel (%p118) target = $region12
      $region11: #{tpu_custom_call.1} parent=5 // pred_region
        %s122 = ssub.s32 %s14, 1
      $region12: #{tpu_custom_call.1} parent=5 // pred_fallthru
        _
      %p123 = scmp.lt.s32.totalorder %s14, 2
      // Predicated region
      $region13: #{tpu_custom_call.1} parent=5 // pred_check
        %p124 = pneg %p123
      $region14: #{tpu_custom_call.1} parent=5 // pred_check_branch
        %126 = sbr.rel (%p124) target = $region16
      $region15: #{tpu_custom_call.1} parent=5 // pred_region
        // Predicated region
        $region17: #{tpu_custom_call.1} parent=15 // pred_check
          %p127 = pneg %p48
        $region18: #{tpu_custom_call.1} parent=15 // pred_check_branch
          %129 = sbr.rel (%p127) target = $region20
        $region19: #{tpu_custom_call.1} parent=15 // pred_region
          %s130 = sand.u32 %s38, 1
          %s131 = scalar_lea.sflag [#allocation3], %s130
          %s132 = sand.u32 %s38, 1
          %s133 = smul.addr %s132, 8
          %s134 = scalar_lea.vmem [#allocation2], %s133
          %136 = vsyncadd %s131, 0
          %s137 = sadd.s32 %s22, %s21
          %s138 = smul.addr %s137, 8
          %s139 = scalar_lea.hbm %s0, %s138
          %s141 = sshll.u32 %s139, 4
          %s142 = int_to_ptr.hbm [resolvable:$true] %s141
          %s143 = sshll.u32 %s134, 4
          %s144 = int_to_ptr.vmem [resolvable:$true] %s143
          %146 = dma.hbm_to_vmem [thread:$0]  %s142, 128, %s144, %s131
        $region20: #{tpu_custom_call.1} parent=15 // pred_fallthru
          _
        // Predicated region
        $region21: #{tpu_custom_call.1} parent=15 // pred_check
          %p147 = pneg %p74
        $region22: #{tpu_custom_call.1} parent=15 // pred_check_branch
          %149 = sbr.rel (%p147) target = $region24
        $region23: #{tpu_custom_call.1} parent=15 // pred_region
          %s150 = sand.u32 %s64, 1
          %s151 = scalar_lea.sflag [#allocation5], %s150
          %s152 = sand.u32 %s64, 1
          %s153 = scalar_lea.vmem [#allocation4], %s152
          %155 = vsyncadd %s151, 0
          %s156 = scalar_lea.hbm %s1, %s21
          %s158 = sshll.u32 %s156, 4
          %s159 = int_to_ptr.hbm [resolvable:$true] %s158
          %s160 = sshll.u32 %s153, 4
          %s161 = int_to_ptr.vmem [resolvable:$true] %s160
          %163 = dma.hbm_to_vmem [thread:$0]  %s159, 16, %s161, %s151
        $region24: #{tpu_custom_call.1} parent=15 // pred_fallthru
          _
      $region16: #{tpu_custom_call.1} parent=5 // pred_fallthru
        _
      %p164 = scmp.le.s32.totalorder 1, %s14
      %p165 = scmp.lt.s32.totalorder %s14, 3
      %p166 = pnand %p164, %p165
      %p167 = pneg %p166
      // Predicated region
      $region25: #{tpu_custom_call.1} parent=5 // pred_check
        _
      $region26: #{tpu_custom_call.1} parent=5 // pred_check_branch
        %169 = sbr.rel (%p166) target = $region28
      $region27: #{tpu_custom_call.1} parent=5 // pred_region
        %s170 = ssub.s32 %s14, 1
        %s171 = sand.u32 %s41, 1
        %s172 = scalar_lea.sflag [#allocation3], %s171
        %s173 = sand.u32 %s41, 1
        %s174 = smul.addr %s173, 8
        %s175 = scalar_lea.vmem [#allocation2], %s174
        // Predicated region
        $region29: #{tpu_custom_call.1} parent=27 // pred_check
          %p176 = pneg %p54
        $region30: #{tpu_custom_call.1} parent=27 // pred_check_branch
          %178 = sbr.rel (%p176) target = $region32
        $region31: #{tpu_custom_call.1} parent=27 // pred_region
          %180 = dma.done %s172, 128
        $region32: #{tpu_custom_call.1} parent=27 // pred_fallthru
          _
        %s181 = sand.u32 %s67, 1
        %s182 = scalar_lea.sflag [#allocation5], %s181
        %s183 = sand.u32 %s67, 1
        %s184 = scalar_lea.vmem [#allocation4], %s183
        // Predicated region
        $region33: #{tpu_custom_call.1} parent=27 // pred_check
          %p185 = pneg %p80
        $region34: #{tpu_custom_call.1} parent=27 // pred_check_branch
          %187 = sbr.rel (%p185) target = $region36
        $region35: #{tpu_custom_call.1} parent=27 // pred_region
          %189 = dma.done %s182, 16
        $region36: #{tpu_custom_call.1} parent=27 // pred_fallthru
          _
        %s190 = sand.u32 %s41, 1
        %s191 = scalar_lea.sflag [#allocation3], %s190
        %s192 = sand.u32 %s41, 1
        %s193 = smul.addr %s192, 8
        %s194 = scalar_lea.vmem [#allocation2], %s193
        %p195 = pneg %p54
        %p196 = pneg %p51
        %s197 = sand.u32 %s67, 1
        %s198 = scalar_lea.sflag [#allocation5], %s197
        %s199 = sand.u32 %s67, 1
        %s200 = scalar_lea.vmem [#allocation4], %s199
        %p201 = pneg %p80
        %p202 = pneg %p77
        %p203 = pneg %p108
        %p204 = pneg %p105
        %p205 = scmp.lt.s32.totalorder %s23, 1
        %s206 = scalar_select %p205, %s23, 1
        %p207 = scmp.lt.s32.totalorder %s24, 0
        %s208 = scalar_select %p207, %s24, 0
        %s209 = sadd.s32 %s208, %s206
        %s210 = smul.addr %s209, 8
        %s211 = scalar_lea.vmem %s2, %s210
        %p212 = scmp.lt.s32.totalorder %s23, 1
        %s213 = scalar_select %p212, %s23, 1
        %p214 = scmp.lt.s32.totalorder %s24, 0
        %s215 = scalar_select %p214, %s24, 0
        %s216 = sadd.s32 %s215, %s213
        %s217 = smul.addr %s216, 8
        %s218 = scalar_lea.vmem %s2, %s217
        %v219 = vld [vmem:[%s175] sm:$0xff]
        %v220 = vld [vmem:[%s184] sm:$0x1]
        %v222 = vperm.slane %v220, 0
        %v224 = vmul.f32 %v219, %v222
        %vm225 = vcmask 261120
        %v226 = vsel %vm225, %v224, 0.0
        %227 = vadd.xlane.f32.xlu0 %v226
        %v228 = vpop.xlane.xlu0 %227
        %v229 = vmul.f32 %v228, 0.17677669
        %vm230 = vcmask 7168
        %231 = vst.msk [vmem:[%s218] sm:$0xff] %vm230, %v229
        %p232 = scmp.lt.s32.totalorder %s23, 1
        %s233 = scalar_select %p232, %s23, 1
        %p234 = scmp.lt.s32.totalorder %s24, 0
        %s235 = scalar_select %p234, %s24, 0
        %s236 = sadd.s32 %s235, %s233
        %s237 = smul.addr %s236, 8
        %s238 = scalar_lea.vmem %s2, %s237
        // Predicated region
        $region37: #{tpu_custom_call.1} parent=27 // pred_check
          %p239 = pneg %p105
        $region38: #{tpu_custom_call.1} parent=27 // pred_check_branch
          %241 = sbr.rel (%p239) target = $region40
        $region39: #{tpu_custom_call.1} parent=27 // pred_region
          _
        $region40: #{tpu_custom_call.1} parent=27 // pred_fallthru
          _
      $region28: #{tpu_custom_call.1} parent=5 // pred_fallthru
        _
      %p242 = scmp.le.s32.totalorder 2, %s14
      // Predicated region
      $region41: #{tpu_custom_call.1} parent=5 // pred_check
        %p243 = pneg %p242
      $region42: #{tpu_custom_call.1} parent=5 // pred_check_branch
        %245 = sbr.rel (%p243) target = $region44
      $region43: #{tpu_custom_call.1} parent=5 // pred_region
        %s246 = ssub.s32 %s14, 2
        // Predicated region
        $region45: #{tpu_custom_call.1} parent=43 // pred_check
          %p247 = pneg %p111
        $region46: #{tpu_custom_call.1} parent=43 // pred_check_branch
          %249 = sbr.rel (%p247) target = $region48
        $region47: #{tpu_custom_call.1} parent=43 // pred_region
          %p250 = scmp.lt.s32.totalorder %s25, 1
          %s251 = scalar_select %p250, %s25, 1
          %p252 = scmp.lt.s32.totalorder %s26, 0
          %s253 = scalar_select %p252, %s26, 0
          %s254 = sadd.s32 %s253, %s251
          %s255 = smul.addr %s254, 8
          %s256 = scalar_lea.vmem %s2, %s255
        $region48: #{tpu_custom_call.1} parent=43 // pred_fallthru
          _
      $region44: #{tpu_custom_call.1} parent=5 // pred_fallthru
        _
    $region6: #{tpu_custom_call.1} parent=1 // loop_footer
      %s18 = sadd.s32 1, %s14
    $region7: #{tpu_custom_call.1} parent=1 // loop_footer_branch
      %13 = sbr.rel target = $region3
    $region8: #{tpu_custom_call.1} parent=1 // loop_exit
      _
    %257 = vsyncpa [#allocation3], 1
    %s258 = scalar_lea.sflag [#allocation3], 1
    %259 = vsyncpa %s258, 1
    %260 = vsyncpa [#allocation5], 1
    %s261 = scalar_lea.sflag [#allocation5], 1
    %262 = vsyncpa %s261, 1

</llo_original>
